<compile_context>
chip_gen: v5e
topology: v5e:2x2
jax: 0.10.0
libtpu: 0.0.40
codegen_flags: <defaults>
</compile_context>

<pallas_src>
import jax
import jax.numpy as jnp
from jax import lax
from jax.experimental import pallas as pl
from jax.experimental.pallas import tpu as pltpu


def encoder_kernel(x_ref, we_ref, wih_ref, whh_ref, out_ref, hn_ref, cn_ref):
    # x_ref  : (T, B, D)   time-major input
    # we_ref : (D, E)      Conv1d(k=1) weight, pre-transposed
    # wih_ref: (E, 4H)     fused LSTM input weights, columns ordered [i | f | g | o]
    # whh_ref: (H, 4H)     fused LSTM hidden weights, columns ordered [i | f | g | o]
    T, B, D = x_ref.shape
    E = we_ref.shape[1]
    H = whh_ref.shape[0]

    # ---- 1x1 "conv" == one (T*B, D) x (D, E) matmul on the MXU ----
    x = x_ref[...].reshape(T * B, D)
    emb = jnp.dot(x, we_ref[...], preferred_element_type=jnp.float32)        # (T*B, E)

    # ---- BatchNorm1d (affine=False, train-mode batch stats) folded into the
    #      input projection.  Single traversal: var = E[x^2] - mean^2. ----
    inv_n = 1.0 / (T * B)
    mean = jnp.sum(emb, axis=0, keepdims=True) * inv_n                        # (1, E)
    mean_sq = jnp.sum(emb * emb, axis=0, keepdims=True) * inv_n               # (1, E)
    var = mean_sq - mean * mean
    s = lax.rsqrt(var + 1e-5)                                                 # (1, E)

    wih = wih_ref[...]                                                        # (E, 4H)
    # emb_n @ W_ih = (emb*s) @ W_ih - (mean*s) @ W_ih   (mean term = one (1,4H) f32 bias row)
    emb_s = emb * s                                                           # lane-aligned bcast
    bias = -jnp.dot(mean * s, wih, preferred_element_type=jnp.float32)        # (1, 4H)

    # ---- Hoisted input projection: all T timesteps in one MXU-friendly matmul ----
    xproj = jnp.dot(emb_s, wih, preferred_element_type=jnp.float32) + bias    # (T*B, 4H)

    whh = whh_ref[...]                                                        # (H, 4H)

    # ---- LSTM recurrence: one (B,H) x (H,4H) matmul per step, fully unrolled
    #      (T is a static Python int -> full unroll / straight-line schedule). ----
    h = jnp.zeros((B, H), jnp.float32)
    c = jnp.zeros((B, H), jnp.float32)
    for t in range(T):
        gates = xproj[t * B:(t + 1) * B, :] \
            + jnp.dot(h, whh, preferred_element_type=jnp.float32)             # (B, 4H) lane-dense
        i = jax.nn.sigmoid(gates[:, 0 * H:1 * H])
        f = jax.nn.sigmoid(gates[:, 1 * H:2 * H])
        g = jnp.tanh(gates[:, 2 * H:3 * H])
        o = jax.nn.sigmoid(gates[:, 3 * H:4 * H])
        c = f * c + i * g
        h = o * jnp.tanh(c)
        out_ref[t] = h                                                        # static-index store
    hn_ref[0] = h
    cn_ref[0] = c


def encoder_forward(x_btd, w_embed, w_ih, w_hh):
    """x_btd: (B, T, D) batch-major (same as the PyTorch module's `input`).
    w_embed: (E, D)   Conv1d(k=1) weight (kernel dim squeezed)
    w_ih:    (4H, E)  torch LSTM weight_ih_l0 (gate order i,f,g,o)
    w_hh:    (4H, H)  torch LSTM weight_hh_l0
    returns (encoder_output (T,B,H), (h_n (1,B,H), c_n (1,B,H)))"""
    B, T, D = x_btd.shape
    E = w_embed.shape[0]
    H = w_hh.shape[1]

    # plain-JAX glue: layout / weight-fusion prep for the kernel
    x_tm = jnp.transpose(x_btd, (1, 0, 2)).astype(jnp.float32)        # (T, B, D)
    we_t = jnp.transpose(w_embed).astype(jnp.float32)                 # (D, E)
    wih_cat = jnp.transpose(w_ih).astype(jnp.float32)                 # (E, 4H) cols [i|f|g|o]
    whh_cat = jnp.transpose(w_hh).astype(jnp.float32)                 # (H, 4H) cols [i|f|g|o]

    flops = 2 * T * B * (D * E + E * 4 * H + H * 4 * H) + 12 * T * B * H
    transcendentals = 5 * T * B * H
    bytes_accessed = 4 * (x_tm.size + we_t.size + wih_cat.size + whh_cat.size
                          + T * B * H + 2 * B * H)

    out_shapes = (
        jax.ShapeDtypeStruct((T, B, H), jnp.float32),
        jax.ShapeDtypeStruct((1, B, H), jnp.float32),
        jax.ShapeDtypeStruct((1, B, H), jnp.float32),
    )
    fn = pl.pallas_call(
        encoder_kernel,
        out_shape=out_shapes,
        in_specs=[pl.BlockSpec(memory_space=pltpu.MemorySpace.VMEM)] * 4,
        out_specs=tuple(pl.BlockSpec(memory_space=pltpu.MemorySpace.VMEM) for _ in range(3)),
        cost_estimate=pl.CostEstimate(flops=flops,
                                      transcendentals=transcendentals,
                                      bytes_accessed=bytes_accessed),
    )
    enc_out, h_n, c_n = fn(x_tm, we_t, wih_cat, whh_cat)
    return enc_out, (h_n, c_n)


def encoder_reference(x_btd, w_embed, w_ih, w_hh):
    """Pure-JAX reference of the PyTorch forward (train-mode BN, unfused math)."""
    B, T, D = x_btd.shape
    H = w_hh.shape[1]
    emb = jnp.einsum("btd,ed->bte", x_btd, w_embed)                 # Conv1d k=1, no bias
    mean = jnp.mean(emb, axis=(0, 1), keepdims=True)
    var = jnp.mean(jnp.square(emb - mean), axis=(0, 1), keepdims=True)
    emb_n = (emb - mean) / jnp.sqrt(var + 1e-5)
    emb_tm = jnp.transpose(emb_n, (1, 0, 2))                        # (T, B, E)

    w_ii, w_if, w_ig, w_io = jnp.split(w_ih, 4, axis=0)
    w_hi, w_hf, w_hg, w_ho = jnp.split(w_hh, 4, axis=0)

    def step(carry, x_t):
        h, c = carry
        i = jax.nn.sigmoid(x_t @ w_ii.T + h @ w_hi.T)
        f = jax.nn.sigmoid(x_t @ w_if.T + h @ w_hf.T)
        g = jnp.tanh(x_t @ w_ig.T + h @ w_hg.T)
        o = jax.nn.sigmoid(x_t @ w_io.T + h @ w_ho.T)
        c_new = f * c + i * g
        h_new = o * jnp.tanh(c_new)
        return (h_new, c_new), h_new

    (h_fin, c_fin), outs = lax.scan(step, (jnp.zeros((B, H)), jnp.zeros((B, H))), emb_tm)
    return outs, (h_fin[None], c_fin[None])


if __name__ == "__main__":
    # config: batch_size=2, max_length=8, input_dimension=4, input_embed=32, hidden_dim=32
    B, T, D, E, H = 2, 8, 4, 32, 32

    key = jax.random.PRNGKey(0)
    k_x, k_we, k_ih, k_hh = jax.random.split(key, 4)

    x = jax.random.normal(k_x, (B, T, D), dtype=jnp.float32)
    w_embed = jax.random.uniform(k_we, (E, D), jnp.float32, -1.0 / D ** 0.5, 1.0 / D ** 0.5)
    w_ih = jax.random.uniform(k_ih, (4 * H, E), jnp.float32, -1.0 / H ** 0.5, 1.0 / H ** 0.5)
    w_hh = jax.random.uniform(k_hh, (4 * H, H), jnp.float32, -1.0 / H ** 0.5, 1.0 / H ** 0.5)

    enc_out, (h_n, c_n) = encoder_forward(x, w_embed, w_ih, w_hh)
    jax.block_until_ready((enc_out, h_n, c_n))

    ref_out, (ref_h, ref_c) = encoder_reference(x, w_embed, w_ih, w_hh)
    assert enc_out.shape == (T, B, H) and h_n.shape == (1, B, H) and c_n.shape == (1, B, H)
    # slightly relaxed tolerance: BN scale/mean are folded into the projection (different
    # f32 summation order than the unfused reference), semantics are identical
    assert jnp.allclose(enc_out, ref_out, atol=1e-4, rtol=1e-4)
    assert jnp.allclose(h_n, ref_h, atol=1e-4, rtol=1e-4)
    assert jnp.allclose(c_n, ref_c, atol=1e-4, rtol=1e-4)

    print("KERNEL_OK")
</pallas_src>

<mosaic_0001>
module attributes {stable_mosaic.version = 11 : i64} {
  func.func @encoder_kernel(%arg0: memref<8x2x4xf32, #tpu.memory_space<vmem>>, %arg1: memref<4x32xf32, #tpu.memory_space<vmem>>, %arg2: memref<32x128xf32, #tpu.memory_space<vmem>>, %arg3: memref<32x128xf32, #tpu.memory_space<vmem>>, %arg4: memref<8x2x32xf32, #tpu.memory_space<vmem>>, %arg5: memref<1x2x32xf32, #tpu.memory_space<vmem>>, %arg6: memref<1x2x32xf32, #tpu.memory_space<vmem>>) attributes {dimension_semantics = [], scalar_prefetch = 0 : i64, scratch_operands = 0 : i64, tpu.core_type = #tpu.core_type<tc>} {
    %c0 = arith.constant 0 : index
    %c0_0 = arith.constant 0 : index
    %c0_1 = arith.constant 0 : index
    %0 = vector.load %arg0[%c0, %c0_0, %c0_1] : memref<8x2x4xf32, #tpu.memory_space<vmem>>, vector<8x2x4xf32>
    %1 = vector.shape_cast %0 : vector<8x2x4xf32> to vector<16x4xf32>
    %c0_2 = arith.constant 0 : index
    %c0_3 = arith.constant 0 : index
    %2 = vector.load %arg1[%c0_2, %c0_3] : memref<4x32xf32, #tpu.memory_space<vmem>>, vector<4x32xf32>
    %cst = arith.constant dense<0.000000e+00> : vector<16x32xf32>
    %3 = tpu.matmul %1, %2, %cst {dimension_numbers = #tpu.dot_dimension_numbers<[1], [0], [0], [1], [0, 0, 1, 1], [], []>} : vector<16x4xf32>, vector<4x32xf32>, vector<16x32xf32> -> vector<16x32xf32>
    %cst_4 = arith.constant dense<0.000000e+00> : vector<32xf32>
    %4 = vector.multi_reduction <add>, %3, %cst_4 [0] : vector<16x32xf32> to vector<32xf32>
    %5 = vector.shape_cast %4 : vector<32xf32> to vector<1x32xf32>
    %cst_5 = arith.constant 6.250000e-02 : f32
    %6 = vector.broadcast %cst_5 : f32 to vector<1x32xf32>
    %7 = arith.mulf %5, %6 : vector<1x32xf32>
    %8 = arith.mulf %3, %3 : vector<16x32xf32>
    %cst_6 = arith.constant dense<0.000000e+00> : vector<32xf32>
    %9 = vector.multi_reduction <add>, %8, %cst_6 [0] : vector<16x32xf32> to vector<32xf32>
    %10 = vector.shape_cast %9 : vector<32xf32> to vector<1x32xf32>
    %cst_7 = arith.constant 6.250000e-02 : f32
    %11 = vector.broadcast %cst_7 : f32 to vector<1x32xf32>
    %12 = arith.mulf %10, %11 : vector<1x32xf32>
    %13 = arith.mulf %7, %7 : vector<1x32xf32>
    %14 = arith.subf %12, %13 : vector<1x32xf32>
    %cst_8 = arith.constant 9.99999974E-6 : f32
    %15 = vector.broadcast %cst_8 : f32 to vector<1x32xf32>
    %16 = arith.addf %14, %15 : vector<1x32xf32>
    %17 = math.rsqrt %16 : vector<1x32xf32>
    %c0_9 = arith.constant 0 : index
    %c0_10 = arith.constant 0 : index
    %18 = vector.load %arg2[%c0_9, %c0_10] : memref<32x128xf32, #tpu.memory_space<vmem>>, vector<32x128xf32>
    %19 = vector.broadcast %17 : vector<1x32xf32> to vector<16x32xf32>
    %20 = arith.mulf %3, %19 : vector<16x32xf32>
    %21 = arith.mulf %7, %17 : vector<1x32xf32>
    %cst_11 = arith.constant dense<0.000000e+00> : vector<1x128xf32>
    %22 = tpu.matmul %21, %18, %cst_11 {dimension_numbers = #tpu.dot_dimension_numbers<[1], [0], [0], [1], [0, 0, 1, 1], [], []>} : vector<1x32xf32>, vector<32x128xf32>, vector<1x128xf32> -> vector<1x128xf32>
    %cst_12 = arith.constant 0.000000e+00 : f32
    %23 = vector.broadcast %cst_12 : f32 to vector<1x128xf32>
    %24 = arith.subf %23, %22 : vector<1x128xf32>
    %cst_13 = arith.constant dense<0.000000e+00> : vector<16x128xf32>
    %25 = tpu.matmul %20, %18, %cst_13 {dimension_numbers = #tpu.dot_dimension_numbers<[1], [0], [0], [1], [0, 0, 1, 1], [], []>} : vector<16x32xf32>, vector<32x128xf32>, vector<16x128xf32> -> vector<16x128xf32>
    %26 = vector.broadcast %24 : vector<1x128xf32> to vector<16x128xf32>
    %27 = arith.addf %25, %26 : vector<16x128xf32>
    %c0_14 = arith.constant 0 : index
    %c0_15 = arith.constant 0 : index
    %28 = vector.load %arg3[%c0_14, %c0_15] : memref<32x128xf32, #tpu.memory_space<vmem>>, vector<32x128xf32>
    %cst_16 = arith.constant 0.000000e+00 : f32
    %29 = vector.broadcast %cst_16 : f32 to vector<2x32xf32>
    %cst_17 = arith.constant 0.000000e+00 : f32
    %30 = vector.broadcast %cst_17 : f32 to vector<2x32xf32>
    %31 = vector.extract_strided_slice %27 {offsets = [0, 0], sizes = [2, 128], strides = [1, 1]} : vector<16x128xf32> to vector<2x128xf32>
    %cst_18 = arith.constant dense<0.000000e+00> : vector<2x128xf32>
    %32 = tpu.matmul %29, %28, %cst_18 {dimension_numbers = #tpu.dot_dimension_numbers<[1], [0], [0], [1], [0, 0, 1, 1], [], []>} : vector<2x32xf32>, vector<32x128xf32>, vector<2x128xf32> -> vector<2x128xf32>
    %33 = arith.addf %31, %32 : vector<2x128xf32>
    %34 = vector.extract_strided_slice %33 {offsets = [0, 0], sizes = [2, 32], strides = [1, 1]} : vector<2x128xf32> to vector<2x32xf32>
    %35 = arith.negf %34 : vector<2x32xf32>
    %36 = math.exp %35 : vector<2x32xf32>
    %cst_19 = arith.constant 1.000000e+00 : f32
    %37 = vector.broadcast %cst_19 : f32 to vector<2x32xf32>
    %38 = arith.addf %37, %36 : vector<2x32xf32>
    %39 = arith.divf %37, %38 : vector<2x32xf32>
    %40 = vector.extract_strided_slice %33 {offsets = [0, 32], sizes = [2, 32], strides = [1, 1]} : vector<2x128xf32> to vector<2x32xf32>
    %41 = arith.negf %40 : vector<2x32xf32>
    %42 = math.exp %41 : vector<2x32xf32>
    %cst_20 = arith.constant 1.000000e+00 : f32
    %43 = vector.broadcast %cst_20 : f32 to vector<2x32xf32>
    %44 = arith.addf %43, %42 : vector<2x32xf32>
    %45 = arith.divf %43, %44 : vector<2x32xf32>
    %46 = vector.extract_strided_slice %33 {offsets = [0, 64], sizes = [2, 32], strides = [1, 1]} : vector<2x128xf32> to vector<2x32xf32>
    %47 = math.tanh %46 : vector<2x32xf32>
    %48 = vector.extract_strided_slice %33 {offsets = [0, 96], sizes = [2, 32], strides = [1, 1]} : vector<2x128xf32> to vector<2x32xf32>
    %49 = arith.negf %48 : vector<2x32xf32>
    %50 = math.exp %49 : vector<2x32xf32>
    %cst_21 = arith.constant 1.000000e+00 : f32
    %51 = vector.broadcast %cst_21 : f32 to vector<2x32xf32>
    %52 = arith.addf %51, %50 : vector<2x32xf32>
    %53 = arith.divf %51, %52 : vector<2x32xf32>
    %54 = arith.mulf %45, %30 : vector<2x32xf32>
    %55 = arith.mulf %39, %47 : vector<2x32xf32>
    %56 = arith.addf %54, %55 : vector<2x32xf32>
    %57 = math.tanh %56 : vector<2x32xf32>
    %58 = arith.mulf %53, %57 : vector<2x32xf32>
    %c0_22 = arith.constant 0 : index
    %c0_23 = arith.constant 0 : index
    %c0_24 = arith.constant 0 : index
    %59 = vector.load %arg4[%c0_22, %c0_23, %c0_24] : memref<8x2x32xf32, #tpu.memory_space<vmem>>, vector<1x2x32xf32>
    %60 = vector.shape_cast %59 : vector<1x2x32xf32> to vector<2x32xf32>
    %61 = vector.shape_cast %58 : vector<2x32xf32> to vector<1x2x32xf32>
    tpu.vector_store %arg4[%c0_22, %c0_23, %c0_24], %61 {strides = array<i32>} : memref<8x2x32xf32, #tpu.memory_space<vmem>>, vector<1x2x32xf32>,
    %62 = vector.extract_strided_slice %27 {offsets = [2, 0], sizes = [2, 128], strides = [1, 1]} : vector<16x128xf32> to vector<2x128xf32>
    %cst_25 = arith.constant dense<0.000000e+00> : vector<2x128xf32>
    %63 = tpu.matmul %58, %28, %cst_25 {dimension_numbers = #tpu.dot_dimension_numbers<[1], [0], [0], [1], [0, 0, 1, 1], [], []>} : vector<2x32xf32>, vector<32x128xf32>, vector<2x128xf32> -> vector<2x128xf32>
    %64 = arith.addf %62, %63 : vector<2x128xf32>
    %65 = vector.extract_strided_slice %64 {offsets = [0, 0], sizes = [2, 32], strides = [1, 1]} : vector<2x128xf32> to vector<2x32xf32>
    %66 = arith.negf %65 : vector<2x32xf32>
    %67 = math.exp %66 : vector<2x32xf32>
    %cst_26 = arith.constant 1.000000e+00 : f32
    %68 = vector.broadcast %cst_26 : f32 to vector<2x32xf32>
    %69 = arith.addf %68, %67 : vector<2x32xf32>
    %70 = arith.divf %68, %69 : vector<2x32xf32>
    %71 = vector.extract_strided_slice %64 {offsets = [0, 32], sizes = [2, 32], strides = [1, 1]} : vector<2x128xf32> to vector<2x32xf32>
    %72 = arith.negf %71 : vector<2x32xf32>
    %73 = math.exp %72 : vector<2x32xf32>
    %cst_27 = arith.constant 1.000000e+00 : f32
    %74 = vector.broadcast %cst_27 : f32 to vector<2x32xf32>
    %75 = arith.addf %74, %73 : vector<2x32xf32>
    %76 = arith.divf %74, %75 : vector<2x32xf32>
    %77 = vector.extract_strided_slice %64 {offsets = [0, 64], sizes = [2, 32], strides = [1, 1]} : vector<2x128xf32> to vector<2x32xf32>
    %78 = math.tanh %77 : vector<2x32xf32>
    %79 = vector.extract_strided_slice %64 {offsets = [0, 96], sizes = [2, 32], strides = [1, 1]} : vector<2x128xf32> to vector<2x32xf32>
    %80 = arith.negf %79 : vector<2x32xf32>
    %81 = math.exp %80 : vector<2x32xf32>
    %cst_28 = arith.constant 1.000000e+00 : f32
    %82 = vector.broadcast %cst_28 : f32 to vector<2x32xf32>
    %83 = arith.addf %82, %81 : vector<2x32xf32>
    %84 = arith.divf %82, %83 : vector<2x32xf32>
    %85 = arith.mulf %76, %56 : vector<2x32xf32>
    %86 = arith.mulf %70, %78 : vector<2x32xf32>
    %87 = arith.addf %85, %86 : vector<2x32xf32>
    %88 = math.tanh %87 : vector<2x32xf32>
    %89 = arith.mulf %84, %88 : vector<2x32xf32>
    %c1 = arith.constant 1 : index
    %c0_29 = arith.constant 0 : index
    %c0_30 = arith.constant 0 : index
    %90 = vector.load %arg4[%c1, %c0_29, %c0_30] : memref<8x2x32xf32, #tpu.memory_space<vmem>>, vector<1x2x32xf32>
    %91 = vector.shape_cast %90 : vector<1x2x32xf32> to vector<2x32xf32>
    %92 = vector.shape_cast %89 : vector<2x32xf32> to vector<1x2x32xf32>
    tpu.vector_store %arg4[%c1, %c0_29, %c0_30], %92 {strides = array<i32>} : memref<8x2x32xf32, #tpu.memory_space<vmem>>, vector<1x2x32xf32>,
    %93 = vector.extract_strided_slice %27 {offsets = [4, 0], sizes = [2, 128], strides = [1, 1]} : vector<16x128xf32> to vector<2x128xf32>
    %cst_31 = arith.constant dense<0.000000e+00> : vector<2x128xf32>
    %94 = tpu.matmul %89, %28, %cst_31 {dimension_numbers = #tpu.dot_dimension_numbers<[1], [0], [0], [1], [0, 0, 1, 1], [], []>} : vector<2x32xf32>, vector<32x128xf32>, vector<2x128xf32> -> vector<2x128xf32>
    %95 = arith.addf %93, %94 : vector<2x128xf32>
    %96 = vector.extract_strided_slice %95 {offsets = [0, 0], sizes = [2, 32], strides = [1, 1]} : vector<2x128xf32> to vector<2x32xf32>
    %97 = arith.negf %96 : vector<2x32xf32>
    %98 = math.exp %97 : vector<2x32xf32>
    %cst_32 = arith.constant 1.000000e+00 : f32
    %99 = vector.broadcast %cst_32 : f32 to vector<2x32xf32>
    %100 = arith.addf %99, %98 : vector<2x32xf32>
    %101 = arith.divf %99, %100 : vector<2x32xf32>
    %102 = vector.extract_strided_slice %95 {offsets = [0, 32], sizes = [2, 32], strides = [1, 1]} : vector<2x128xf32> to vector<2x32xf32>
    %103 = arith.negf %102 : vector<2x32xf32>
    %104 = math.exp %103 : vector<2x32xf32>
    %cst_33 = arith.constant 1.000000e+00 : f32
    %105 = vector.broadcast %cst_33 : f32 to vector<2x32xf32>
    %106 = arith.addf %105, %104 : vector<2x32xf32>
    %107 = arith.divf %105, %106 : vector<2x32xf32>
    %108 = vector.extract_strided_slice %95 {offsets = [0, 64], sizes = [2, 32], strides = [1, 1]} : vector<2x128xf32> to vector<2x32xf32>
    %109 = math.tanh %108 : vector<2x32xf32>
    %110 = vector.extract_strided_slice %95 {offsets = [0, 96], sizes = [2, 32], strides = [1, 1]} : vector<2x128xf32> to vector<2x32xf32>
    %111 = arith.negf %110 : vector<2x32xf32>
    %112 = math.exp %111 : vector<2x32xf32>
    %cst_34 = arith.constant 1.000000e+00 : f32
    %113 = vector.broadcast %cst_34 : f32 to vector<2x32xf32>
    %114 = arith.addf %113, %112 : vector<2x32xf32>
    %115 = arith.divf %113, %114 : vector<2x32xf32>
    %116 = arith.mulf %107, %87 : vector<2x32xf32>
    %117 = arith.mulf %101, %109 : vector<2x32xf32>
    %118 = arith.addf %116, %117 : vector<2x32xf32>
    %119 = math.tanh %118 : vector<2x32xf32>
    %120 = arith.mulf %115, %119 : vector<2x32xf32>
    %c2 = arith.constant 2 : index
    %c0_35 = arith.constant 0 : index
    %c0_36 = arith.constant 0 : index
    %121 = vector.load %arg4[%c2, %c0_35, %c0_36] : memref<8x2x32xf32, #tpu.memory_space<vmem>>, vector<1x2x32xf32>
    %122 = vector.shape_cast %121 : vector<1x2x32xf32> to vector<2x32xf32>
    %123 = vector.shape_cast %120 : vector<2x32xf32> to vector<1x2x32xf32>
    tpu.vector_store %arg4[%c2, %c0_35, %c0_36], %123 {strides = array<i32>} : memref<8x2x32xf32, #tpu.memory_space<vmem>>, vector<1x2x32xf32>,
    %124 = vector.extract_strided_slice %27 {offsets = [6, 0], sizes = [2, 128], strides = [1, 1]} : vector<16x128xf32> to vector<2x128xf32>
    %cst_37 = arith.constant dense<0.000000e+00> : vector<2x128xf32>
    %125 = tpu.matmul %120, %28, %cst_37 {dimension_numbers = #tpu.dot_dimension_numbers<[1], [0], [0], [1], [0, 0, 1, 1], [], []>} : vector<2x32xf32>, vector<32x128xf32>, vector<2x128xf32> -> vector<2x128xf32>
    %126 = arith.addf %124, %125 : vector<2x128xf32>
    %127 = vector.extract_strided_slice %126 {offsets = [0, 0], sizes = [2, 32], strides = [1, 1]} : vector<2x128xf32> to vector<2x32xf32>
    %128 = arith.negf %127 : vector<2x32xf32>
    %129 = math.exp %128 : vector<2x32xf32>
    %cst_38 = arith.constant 1.000000e+00 : f32
    %130 = vector.broadcast %cst_38 : f32 to vector<2x32xf32>
    %131 = arith.addf %130, %129 : vector<2x32xf32>
    %132 = arith.divf %130, %131 : vector<2x32xf32>
    %133 = vector.extract_strided_slice %126 {offsets = [0, 32], sizes = [2, 32], strides = [1, 1]} : vector<2x128xf32> to vector<2x32xf32>
    %134 = arith.negf %133 : vector<2x32xf32>
    %135 = math.exp %134 : vector<2x32xf32>
    %cst_39 = arith.constant 1.000000e+00 : f32
    %136 = vector.broadcast %cst_39 : f32 to vector<2x32xf32>
    %137 = arith.addf %136, %135 : vector<2x32xf32>
    %138 = arith.divf %136, %137 : vector<2x32xf32>
    %139 = vector.extract_strided_slice %126 {offsets = [0, 64], sizes = [2, 32], strides = [1, 1]} : vector<2x128xf32> to vector<2x32xf32>
    %140 = math.tanh %139 : vector<2x32xf32>
    %141 = vector.extract_strided_slice %126 {offsets = [0, 96], sizes = [2, 32], strides = [1, 1]} : vector<2x128xf32> to vector<2x32xf32>
    %142 = arith.negf %141 : vector<2x32xf32>
    %143 = math.exp %142 : vector<2x32xf32>
    %cst_40 = arith.constant 1.000000e+00 : f32
    %144 = vector.broadcast %cst_40 : f32 to vector<2x32xf32>
    %145 = arith.addf %144, %143 : vector<2x32xf32>
    %146 = arith.divf %144, %145 : vector<2x32xf32>
    %147 = arith.mulf %138, %118 : vector<2x32xf32>
    %148 = arith.mulf %132, %140 : vector<2x32xf32>
    %149 = arith.addf %147, %148 : vector<2x32xf32>
    %150 = math.tanh %149 : vector<2x32xf32>
    %151 = arith.mulf %146, %150 : vector<2x32xf32>
    %c3 = arith.constant 3 : index
    %c0_41 = arith.constant 0 : index
    %c0_42 = arith.constant 0 : index
    %152 = vector.load %arg4[%c3, %c0_41, %c0_42] : memref<8x2x32xf32, #tpu.memory_space<vmem>>, vector<1x2x32xf32>
    %153 = vector.shape_cast %152 : vector<1x2x32xf32> to vector<2x32xf32>
    %154 = vector.shape_cast %151 : vector<2x32xf32> to vector<1x2x32xf32>
    tpu.vector_store %arg4[%c3, %c0_41, %c0_42], %154 {strides = array<i32>} : memref<8x2x32xf32, #tpu.memory_space<vmem>>, vector<1x2x32xf32>,
    %155 = vector.extract_strided_slice %27 {offsets = [8, 0], sizes = [2, 128], strides = [1, 1]} : vector<16x128xf32> to vector<2x128xf32>
    %cst_43 = arith.constant dense<0.000000e+00> : vector<2x128xf32>
    %156 = tpu.matmul %151, %28, %cst_43 {dimension_numbers = #tpu.dot_dimension_numbers<[1], [0], [0], [1], [0, 0, 1, 1], [], []>} : vector<2x32xf32>, vector<32x128xf32>, vector<2x128xf32> -> vector<2x128xf32>
    %157 = arith.addf %155, %156 : vector<2x128xf32>
    %158 = vector.extract_strided_slice %157 {offsets = [0, 0], sizes = [2, 32], strides = [1, 1]} : vector<2x128xf32> to vector<2x32xf32>
    %159 = arith.negf %158 : vector<2x32xf32>
    %160 = math.exp %159 : vector<2x32xf32>
    %cst_44 = arith.constant 1.000000e+00 : f32
    %161 = vector.broadcast %cst_44 : f32 to vector<2x32xf32>
    %162 = arith.addf %161, %160 : vector<2x32xf32>
    %163 = arith.divf %161, %162 : vector<2x32xf32>
    %164 = vector.extract_strided_slice %157 {offsets = [0, 32], sizes = [2, 32], strides = [1, 1]} : vector<2x128xf32> to vector<2x32xf32>
    %165 = arith.negf %164 : vector<2x32xf32>
    %166 = math.exp %165 : vector<2x32xf32>
    %cst_45 = arith.constant 1.000000e+00 : f32
    %167 = vector.broadcast %cst_45 : f32 to vector<2x32xf32>
    %168 = arith.addf %167, %166 : vector<2x32xf32>
    %169 = arith.divf %167, %168 : vector<2x32xf32>
    %170 = vector.extract_strided_slice %157 {offsets = [0, 64], sizes = [2, 32], strides = [1, 1]} : vector<2x128xf32> to vector<2x32xf32>
    %171 = math.tanh %170 : vector<2x32xf32>
    %172 = vector.extract_strided_slice %157 {offsets = [0, 96], sizes = [2, 32], strides = [1, 1]} : vector<2x128xf32> to vector<2x32xf32>
    %173 = arith.negf %172 : vector<2x32xf32>
    %174 = math.exp %173 : vector<2x32xf32>
    %cst_46 = arith.constant 1.000000e+00 : f32
    %175 = vector.broadcast %cst_46 : f32 to vector<2x32xf32>
    %176 = arith.addf %175, %174 : vector<2x32xf32>
    %177 = arith.divf %175, %176 : vector<2x32xf32>
    %178 = arith.mulf %169, %149 : vector<2x32xf32>
    %179 = arith.mulf %163, %171 : vector<2x32xf32>
    %180 = arith.addf %178, %179 : vector<2x32xf32>
    %181 = math.tanh %180 : vector<2x32xf32>
    %182 = arith.mulf %177, %181 : vector<2x32xf32>
    %c4 = arith.constant 4 : index
    %c0_47 = arith.constant 0 : index
    %c0_48 = arith.constant 0 : index
    %183 = vector.load %arg4[%c4, %c0_47, %c0_48] : memref<8x2x32xf32, #tpu.memory_space<vmem>>, vector<1x2x32xf32>
    %184 = vector.shape_cast %183 : vector<1x2x32xf32> to vector<2x32xf32>
    %185 = vector.shape_cast %182 : vector<2x32xf32> to vector<1x2x32xf32>
    tpu.vector_store %arg4[%c4, %c0_47, %c0_48], %185 {strides = array<i32>} : memref<8x2x32xf32, #tpu.memory_space<vmem>>, vector<1x2x32xf32>,
    %186 = vector.extract_strided_slice %27 {offsets = [10, 0], sizes = [2, 128], strides = [1, 1]} : vector<16x128xf32> to vector<2x128xf32>
    %cst_49 = arith.constant dense<0.000000e+00> : vector<2x128xf32>
    %187 = tpu.matmul %182, %28, %cst_49 {dimension_numbers = #tpu.dot_dimension_numbers<[1], [0], [0], [1], [0, 0, 1, 1], [], []>} : vector<2x32xf32>, vector<32x128xf32>, vector<2x128xf32> -> vector<2x128xf32>
    %188 = arith.addf %186, %187 : vector<2x128xf32>
    %189 = vector.extract_strided_slice %188 {offsets = [0, 0], sizes = [2, 32], strides = [1, 1]} : vector<2x128xf32> to vector<2x32xf32>
    %190 = arith.negf %189 : vector<2x32xf32>
    %191 = math.exp %190 : vector<2x32xf32>
    %cst_50 = arith.constant 1.000000e+00 : f32
    %192 = vector.broadcast %cst_50 : f32 to vector<2x32xf32>
    %193 = arith.addf %192, %191 : vector<2x32xf32>
    %194 = arith.divf %192, %193 : vector<2x32xf32>
    %195 = vector.extract_strided_slice %188 {offsets = [0, 32], sizes = [2, 32], strides = [1, 1]} : vector<2x128xf32> to vector<2x32xf32>
    %196 = arith.negf %195 : vector<2x32xf32>
    %197 = math.exp %196 : vector<2x32xf32>
    %cst_51 = arith.constant 1.000000e+00 : f32
    %198 = vector.broadcast %cst_51 : f32 to vector<2x32xf32>
    %199 = arith.addf %198, %197 : vector<2x32xf32>
    %200 = arith.divf %198, %199 : vector<2x32xf32>
    %201 = vector.extract_strided_slice %188 {offsets = [0, 64], sizes = [2, 32], strides = [1, 1]} : vector<2x128xf32> to vector<2x32xf32>
    %202 = math.tanh %201 : vector<2x32xf32>
    %203 = vector.extract_strided_slice %188 {offsets = [0, 96], sizes = [2, 32], strides = [1, 1]} : vector<2x128xf32> to vector<2x32xf32>
    %204 = arith.negf %203 : vector<2x32xf32>
    %205 = math.exp %204 : vector<2x32xf32>
    %cst_52 = arith.constant 1.000000e+00 : f32
    %206 = vector.broadcast %cst_52 : f32 to vector<2x32xf32>
    %207 = arith.addf %206, %205 : vector<2x32xf32>
    %208 = arith.divf %206, %207 : vector<2x32xf32>
    %209 = arith.mulf %200, %180 : vector<2x32xf32>
    %210 = arith.mulf %194, %202 : vector<2x32xf32>
    %211 = arith.addf %209, %210 : vector<2x32xf32>
    %212 = math.tanh %211 : vector<2x32xf32>
    %213 = arith.mulf %208, %212 : vector<2x32xf32>
    %c5 = arith.constant 5 : index
    %c0_53 = arith.constant 0 : index
    %c0_54 = arith.constant 0 : index
    %214 = vector.load %arg4[%c5, %c0_53, %c0_54] : memref<8x2x32xf32, #tpu.memory_space<vmem>>, vector<1x2x32xf32>
    %215 = vector.shape_cast %214 : vector<1x2x32xf32> to vector<2x32xf32>
    %216 = vector.shape_cast %213 : vector<2x32xf32> to vector<1x2x32xf32>
    tpu.vector_store %arg4[%c5, %c0_53, %c0_54], %216 {strides = array<i32>} : memref<8x2x32xf32, #tpu.memory_space<vmem>>, vector<1x2x32xf32>,
    %217 = vector.extract_strided_slice %27 {offsets = [12, 0], sizes = [2, 128], strides = [1, 1]} : vector<16x128xf32> to vector<2x128xf32>
    %cst_55 = arith.constant dense<0.000000e+00> : vector<2x128xf32>
    %218 = tpu.matmul %213, %28, %cst_55 {dimension_numbers = #tpu.dot_dimension_numbers<[1], [0], [0], [1], [0, 0, 1, 1], [], []>} : vector<2x32xf32>, vector<32x128xf32>, vector<2x128xf32> -> vector<2x128xf32>
    %219 = arith.addf %217, %218 : vector<2x128xf32>
    %220 = vector.extract_strided_slice %219 {offsets = [0, 0], sizes = [2, 32], strides = [1, 1]} : vector<2x128xf32> to vector<2x32xf32>
    %221 = arith.negf %220 : vector<2x32xf32>
    %222 = math.exp %221 : vector<2x32xf32>
    %cst_56 = arith.constant 1.000000e+00 : f32
    %223 = vector.broadcast %cst_56 : f32 to vector<2x32xf32>
    %224 = arith.addf %223, %222 : vector<2x32xf32>
    %225 = arith.divf %223, %224 : vector<2x32xf32>
    %226 = vector.extract_strided_slice %219 {offsets = [0, 32], sizes = [2, 32], strides = [1, 1]} : vector<2x128xf32> to vector<2x32xf32>
    %227 = arith.negf %226 : vector<2x32xf32>
    %228 = math.exp %227 : vector<2x32xf32>
    %cst_57 = arith.constant 1.000000e+00 : f32
    %229 = vector.broadcast %cst_57 : f32 to vector<2x32xf32>
    %230 = arith.addf %229, %228 : vector<2x32xf32>
    %231 = arith.divf %229, %230 : vector<2x32xf32>
    %232 = vector.extract_strided_slice %219 {offsets = [0, 64], sizes = [2, 32], strides = [1, 1]} : vector<2x128xf32> to vector<2x32xf32>
    %233 = math.tanh %232 : vector<2x32xf32>
    %234 = vector.extract_strided_slice %219 {offsets = [0, 96], sizes = [2, 32], strides = [1, 1]} : vector<2x128xf32> to vector<2x32xf32>
    %235 = arith.negf %234 : vector<2x32xf32>
    %236 = math.exp %235 : vector<2x32xf32>
    %cst_58 = arith.constant 1.000000e+00 : f32
    %237 = vector.broadcast %cst_58 : f32 to vector<2x32xf32>
    %238 = arith.addf %237, %236 : vector<2x32xf32>
    %239 = arith.divf %237, %238 : vector<2x32xf32>
    %240 = arith.mulf %231, %211 : vector<2x32xf32>
    %241 = arith.mulf %225, %233 : vector<2x32xf32>
    %242 = arith.addf %240, %241 : vector<2x32xf32>
    %243 = math.tanh %242 : vector<2x32xf32>
    %244 = arith.mulf %239, %243 : vector<2x32xf32>
    %c6 = arith.constant 6 : index
    %c0_59 = arith.constant 0 : index
    %c0_60 = arith.constant 0 : index
    %245 = vector.load %arg4[%c6, %c0_59, %c0_60] : memref<8x2x32xf32, #tpu.memory_space<vmem>>, vector<1x2x32xf32>
    %246 = vector.shape_cast %245 : vector<1x2x32xf32> to vector<2x32xf32>
    %247 = vector.shape_cast %244 : vector<2x32xf32> to vector<1x2x32xf32>
    tpu.vector_store %arg4[%c6, %c0_59, %c0_60], %247 {strides = array<i32>} : memref<8x2x32xf32, #tpu.memory_space<vmem>>, vector<1x2x32xf32>,
    %248 = vector.extract_strided_slice %27 {offsets = [14, 0], sizes = [2, 128], strides = [1, 1]} : vector<16x128xf32> to vector<2x128xf32>
    %cst_61 = arith.constant dense<0.000000e+00> : vector<2x128xf32>
    %249 = tpu.matmul %244, %28, %cst_61 {dimension_numbers = #tpu.dot_dimension_numbers<[1], [0], [0], [1], [0, 0, 1, 1], [], []>} : vector<2x32xf32>, vector<32x128xf32>, vector<2x128xf32> -> vector<2x128xf32>
    %250 = arith.addf %248, %249 : vector<2x128xf32>
    %251 = vector.extract_strided_slice %250 {offsets = [0, 0], sizes = [2, 32], strides = [1, 1]} : vector<2x128xf32> to vector<2x32xf32>
    %252 = arith.negf %251 : vector<2x32xf32>
    %253 = math.exp %252 : vector<2x32xf32>
    %cst_62 = arith.constant 1.000000e+00 : f32
    %254 = vector.broadcast %cst_62 : f32 to vector<2x32xf32>
    %255 = arith.addf %254, %253 : vector<2x32xf32>
    %256 = arith.divf %254, %255 : vector<2x32xf32>
    %257 = vector.extract_strided_slice %250 {offsets = [0, 32], sizes = [2, 32], strides = [1, 1]} : vector<2x128xf32> to vector<2x32xf32>
    %258 = arith.negf %257 : vector<2x32xf32>
    %259 = math.exp %258 : vector<2x32xf32>
    %cst_63 = arith.constant 1.000000e+00 : f32
    %260 = vector.broadcast %cst_63 : f32 to vector<2x32xf32>
    %261 = arith.addf %260, %259 : vector<2x32xf32>
    %262 = arith.divf %260, %261 : vector<2x32xf32>
    %263 = vector.extract_strided_slice %250 {offsets = [0, 64], sizes = [2, 32], strides = [1, 1]} : vector<2x128xf32> to vector<2x32xf32>
    %264 = math.tanh %263 : vector<2x32xf32>
    %265 = vector.extract_strided_slice %250 {offsets = [0, 96], sizes = [2, 32], strides = [1, 1]} : vector<2x128xf32> to vector<2x32xf32>
    %266 = arith.negf %265 : vector<2x32xf32>
    %267 = math.exp %266 : vector<2x32xf32>
    %cst_64 = arith.constant 1.000000e+00 : f32
    %268 = vector.broadcast %cst_64 : f32 to vector<2x32xf32>
    %269 = arith.addf %268, %267 : vector<2x32xf32>
    %270 = arith.divf %268, %269 : vector<2x32xf32>
    %271 = arith.mulf %262, %242 : vector<2x32xf32>
    %272 = arith.mulf %256, %264 : vector<2x32xf32>
    %273 = arith.addf %271, %272 : vector<2x32xf32>
    %274 = math.tanh %273 : vector<2x32xf32>
    %275 = arith.mulf %270, %274 : vector<2x32xf32>
    %c7 = arith.constant 7 : index
    %c0_65 = arith.constant 0 : index
    %c0_66 = arith.constant 0 : index
    %276 = vector.load %arg4[%c7, %c0_65, %c0_66] : memref<8x2x32xf32, #tpu.memory_space<vmem>>, vector<1x2x32xf32>
    %277 = vector.shape_cast %276 : vector<1x2x32xf32> to vector<2x32xf32>
    %278 = vector.shape_cast %275 : vector<2x32xf32> to vector<1x2x32xf32>
    tpu.vector_store %arg4[%c7, %c0_65, %c0_66], %278 {strides = array<i32>} : memref<8x2x32xf32, #tpu.memory_space<vmem>>, vector<1x2x32xf32>,
    %c0_67 = arith.constant 0 : index
    %c0_68 = arith.constant 0 : index
    %c0_69 = arith.constant 0 : index
    %279 = vector.load %arg5[%c0_67, %c0_68, %c0_69] : memref<1x2x32xf32, #tpu.memory_space<vmem>>, vector<1x2x32xf32>
    %280 = vector.shape_cast %279 : vector<1x2x32xf32> to vector<2x32xf32>
    %281 = vector.shape_cast %275 : vector<2x32xf32> to vector<1x2x32xf32>
    tpu.vector_store %arg5[%c0_67, %c0_68, %c0_69], %281 {strides = array<i32>} : memref<1x2x32xf32, #tpu.memory_space<vmem>>, vector<1x2x32xf32>,
    %c0_70 = arith.constant 0 : index
    %c0_71 = arith.constant 0 : index
    %c0_72 = arith.constant 0 : index
    %282 = vector.load %arg6[%c0_70, %c0_71, %c0_72] : memref<1x2x32xf32, #tpu.memory_space<vmem>>, vector<1x2x32xf32>
    %283 = vector.shape_cast %282 : vector<1x2x32xf32> to vector<2x32xf32>
    %284 = vector.shape_cast %273 : vector<2x32xf32> to vector<1x2x32xf32>
    tpu.vector_store %arg6[%c0_70, %c0_71, %c0_72], %284 {strides = array<i32>} : memref<1x2x32xf32, #tpu.memory_space<vmem>>, vector<1x2x32xf32>,
    return
  }
}

</mosaic_0001>

<llo_original>
// kernel: tpu_custom_call.1
$region0: #{tpu_custom_call.1}
  #allocation0 [shape = 'u32[]', space=smem, size = 0x4, offset = 0x4, fixed_abs, tag = 'smem constant byte address 0x4 - core index']
  #allocation1 [shape = 'u32[72,128]{1,0:T(1,128)}', space=vmem, size = 0x9000, scoped, tag = 'internal scratch']
  %s0 = inlined_call_operand.vmem [shape: f32[8,2,4], index: 0, kind: input, shape index: {}]
  %s1 = inlined_call_operand.vmem [shape: f32[4,32], index: 1, kind: input, shape index: {}]
  %s2 = inlined_call_operand.hbm [shape: f32[32,128], index: 2, kind: input, shape index: {}]
  %s3 = inlined_call_operand.hbm [shape: f32[32,128], index: 3, kind: input, shape index: {}]
  %s4 = inlined_call_operand.hbm [shape: f32[8,2,32], index: 4, kind: output, shape index: {0}]
  %s5 = inlined_call_operand.hbm [shape: f32[1,2,32], index: 5, kind: output, shape index: {1}]
  %s6 = inlined_call_operand.hbm [shape: f32[1,2,32], index: 6, kind: output, shape index: {2}]
  %7 = xla_tuple %s4, %s5, %s6
  %s8 = sld [smem:[#allocation0]]
  $region50: #{tpu_custom_call.1} parent=0
    _
  %s10 = ssub.s32 1, %s8
  %s11 = scalar_select 0, %s10, %s8
  $region1: #{tpu_custom_call.1} parent=0
    #allocation2 [shape = 'u8[16384]{0}', space=vmem, size = 0x4000, scoped, tag = 'input window, operand 2, single buffered']
    #allocation3 [shape = 's32[1]{0}', space=sflag, size = 0x4, scoped, tag = 'scoped memory for tpu_custom_call.1']
    #allocation4 [shape = 's32[1]{0}', space=sflag, size = 0x4, scoped, tag = 'scoped memory for tpu_custom_call.1']
    #allocation5 [shape = 'u8[16384]{0}', space=vmem, size = 0x4000, scoped, tag = 'input window, operand 3, single buffered']
    #allocation6 [shape = 's32[1]{0}', space=sflag, size = 0x4, scoped, tag = 'scoped memory for tpu_custom_call.1']
    #allocation7 [shape = 'u8[8192]{0}', space=vmem, size = 0x2000, scoped, tag = 'output window, operand 0, single buffered']
    #allocation8 [shape = 'u8[1024]{0}', space=vmem, size = 0x400, scoped, tag = 'output window, operand 1, single buffered']
    #allocation9 [shape = 's32[1]{0}', space=sflag, size = 0x4, scoped, tag = 'scoped memory for tpu_custom_call.1']
    #allocation10 [shape = 'u8[1024]{0}', space=vmem, size = 0x400, scoped, tag = 'output window, operand 2, single buffered']
    %12 = vsyncpa [#allocation3], 0
    %13 = vsyncpa [#allocation6], 0
    %14 = vsyncpa [#allocation4], 0
    %15 = vsyncpa [#allocation9], 0
    // Predicated region
    $region2: #{tpu_custom_call.1} parent=1 // pred_check
      _
    $region3: #{tpu_custom_call.1} parent=1 // pred_check_branch
      %17 = sbr.rel (0) target = $region5
    $region4: #{tpu_custom_call.1} parent=1 // pred_region
      _
    $region5: #{tpu_custom_call.1} parent=1 // pred_fallthru
      _
    // Predicated region
    $region6: #{tpu_custom_call.1} parent=1 // pred_check
      _
    $region7: #{tpu_custom_call.1} parent=1 // pred_check_branch
      %19 = sbr.rel (0) target = $region9
    $region8: #{tpu_custom_call.1} parent=1 // pred_region
      _
    $region9: #{tpu_custom_call.1} parent=1 // pred_fallthru
      _
    // Predicated region
    $region10: #{tpu_custom_call.1} parent=1 // pred_check
      _
    $region11: #{tpu_custom_call.1} parent=1 // pred_check_branch
      %21 = sbr.rel (0) target = $region13
    $region12: #{tpu_custom_call.1} parent=1 // pred_region
      %23 = vsyncadd [#allocation3], 0
      %s24 = sshll.u32 %s2, 4
      %s25 = int_to_ptr.hbm [resolvable:$true] %s24
      %s26 = sshll.u32 [#allocation2], 4
      %s27 = int_to_ptr.vmem [resolvable:$true] %s26
      %32 = dma.hbm_to_vmem [thread:$0]  %s25, 512, %s27, [#allocation3], 128, 128, 8
    $region13: #{tpu_custom_call.1} parent=1 // pred_fallthru
      _
    // Predicated region
    $region14: #{tpu_custom_call.1} parent=1 // pred_check
      _
    $region15: #{tpu_custom_call.1} parent=1 // pred_check_branch
      %34 = sbr.rel (0) target = $region17
    $region16: #{tpu_custom_call.1} parent=1 // pred_region
      %36 = vsyncadd [#allocation6], 0
      %s37 = sshll.u32 %s3, 4
      %s38 = int_to_ptr.hbm [resolvable:$true] %s37
      %s39 = sshll.u32 [#allocation5], 4
      %s40 = int_to_ptr.vmem [resolvable:$true] %s39
      %45 = dma.hbm_to_vmem [thread:$0]  %s38, 512, %s40, [#allocation6], 128, 128, 8
    $region17: #{tpu_custom_call.1} parent=1 // pred_fallthru
      _
    // Predicated region
    $region18: #{tpu_custom_call.1} parent=1 // pred_check
      _
    $region19: #{tpu_custom_call.1} parent=1 // pred_check_branch
      %47 = sbr.rel (0) target = $region21
    $region20: #{tpu_custom_call.1} parent=1 // pred_region
      %49 = dma.done [#allocation3], 512
    $region21: #{tpu_custom_call.1} parent=1 // pred_fallthru
      _
    // Predicated region
    $region22: #{tpu_custom_call.1} parent=1 // pred_check
      _
    $region23: #{tpu_custom_call.1} parent=1 // pred_check_branch
      %51 = sbr.rel (0) target = $region25
    $region24: #{tpu_custom_call.1} parent=1 // pred_region
      %53 = dma.done [#allocation6], 512
    $region25: #{tpu_custom_call.1} parent=1 // pred_fallthru
      _
    %v54 = vld [vmem:[%s0] sm:$0x3]
    %v55 = vld [vmem:[%s0 + $0x2] sm:$0x3]
    %v56 = vld [vmem:[%s0 + $0x4] sm:$0x3]
    %v57 = vld [vmem:[%s0 + $0x6] sm:$0x3]
    %v58 = vld [vmem:[%s0 + $0x8] sm:$0x3]
    %v59 = vld [vmem:[%s0 + $0xa] sm:$0x3]
    %v60 = vld [vmem:[%s0 + $0xc] sm:$0x3]
    %v61 = vld [vmem:[%s0 + $0xe] sm:$0x3]
    %v62 = vld [vmem:[%s1] sm:$0xf]
    %71 = vst [vmem:[#allocation1] ss:$4 sm:$0xff] %v54
    %s72 = scalar_lea.vmem [#allocation1], 1
    %73 = vst [vmem:[%s72] ss:$4 sm:$0xff] %v55
    %s74 = scalar_lea.vmem [#allocation1], 2
    %75 = vst [vmem:[%s74] ss:$4 sm:$0xff] %v56
    %s76 = scalar_lea.vmem [#allocation1], 3
    %77 = vst [vmem:[%s76] ss:$4 sm:$0xff] %v57
    %s78 = scalar_lea.vmem [#allocation1], 32
    %79 = vst [vmem:[%s78] ss:$4 sm:$0xff] %v58
    %s80 = scalar_lea.vmem [#allocation1], 33
    %81 = vst [vmem:[%s80] ss:$4 sm:$0xff] %v59
    %s82 = scalar_lea.vmem [#allocation1], 34
    %83 = vst [vmem:[%s82] ss:$4 sm:$0xff] %v60
    %s84 = scalar_lea.vmem [#allocation1], 35
    %85 = vst [vmem:[%s84] ss:$4 sm:$0xff] %v61
    %v86 = vld.sshfl [vmem:[#allocation1] sm:$0xff pattern:$0x73625140]
    %v87 = vld.sshfl [vmem:[#allocation1 + $0x20] sm:$0xff pattern:$0x73625140]
    %vm88 = vcmask 31744
    %v89 = vsel %vm88, %v86, 0
    %v91 = vsel %vm88, %v87, 0
    %vm93 = vcmask 1043456
    %v95 = vsel %vm93, %v62, 0
    %97 = vmatpush.msra.mxu0 0.0
    %98 = vmatpush.msra.mxu0 0.0
    %99 = vmatpush.msra.mxu0 0.0
    %100 = vmatpush.msra.mxu0 0.0
    %101 = vmatpush.msra.mxu0 0.0
    %102 = vmatpush.msra.mxu0 0.0
    %103 = vmatpush.msra.mxu0 0.0
    %104 = vmatpush.msra.mxu0 0.0
    %105 = vmatpush.msra.mxu0 0.0
    %106 = vmatpush.msra.mxu0 0.0
    %107 = vmatpush.msra.mxu0 0.0
    %108 = vmatpush.msra.mxu0 0.0
    %109 = vmatpush.msra.mxu0 0.0
    %110 = vmatpush.msra.mxu0 0.0
    %111 = vmatpush.msra.mxu0 0.0
    %112 = vmatpush.msra.mxu0 %v95
    %113 = vmatmul.f32.gmra.mxu0 %v89
    %v114 = vpop.f32.mrf.mxu0
    %v115 = vadd.f32 0.0, %v114
    %116 = vmatmul.f32.gmra.mxu0 %v91
    %v117 = vpop.f32.mrf.mxu0
    %v118 = vadd.f32 0.0, %v117
    %119 = vdwg.mxu0
    %vm120 = vcmask 261120
    %v121 = vsel %vm120, %v115, 0.0
    %v122 = vsel %vm120, %v118, 0.0
    %v123 = vadd.f32 %v121, %v122
    %v124 = vrot.slane %v123, 4
    %v125 = vadd.f32 %v123, %v124
    %v126 = vrot.slane %v125, 2
    %v127 = vadd.f32 %v125, %v126
    %v128 = vrot.slane %v127, 1
    %v129 = vadd.f32 %v127, %v128
    %v130 = vmul.f32 %v129, 0.0625
    %v131 = vmul.f32 %v115, %v115
    %v132 = vmul.f32 %v118, %v118
    %v133 = vsel %vm120, %v131, 0.0
    %v134 = vsel %vm120, %v132, 0.0
    %v135 = vadd.f32 %v133, %v134
    %v136 = vrot.slane %v135, 4
    %v137 = vadd.f32 %v135, %v136
    %v138 = vrot.slane %v137, 2
    %v139 = vadd.f32 %v137, %v138
    %v140 = vrot.slane %v139, 1
    %v141 = vadd.f32 %v139, %v140
    %v142 = vmul.f32 %v141, 0.0625
    %v143 = vmul.f32 %v130, %v130
    %v144 = vsub.f32 %v142, %v143
    %v145 = vadd.f32 %v144, 1e-05
    %v146 = vrsqrt.pop %v145
    %v147 = vmul.f32 %v146, %v145
    %v148 = vmul.f32 %v147, %v146
    %v149 = vmul.f32 0.5, %v148
    %v150 = vsub.f32 1.5, %v149
    %v151 = vmul.f32 %v146, %v150
    %vm152 = vweird.f32 %v145
    %vm153 = vweird.f32 %v146
    %vm154 = vmor %vm152, %vm153
    %v155 = vsel %vm154, %v146, %v151
    %v156 = vld [vmem:[#allocation2] sm:$0xff]
    %v157 = vld [vmem:[#allocation2 + $0x8] sm:$0xff]
    %v158 = vld [vmem:[#allocation2 + $0x10] sm:$0xff]
    %v159 = vld [vmem:[#allocation2 + $0x18] sm:$0xff]
    %v160 = vmul.f32 %v115, %v155
    %v161 = vmul.f32 %v118, %v155
    %v162 = vmul.f32 %v130, %v155
    %v164 = vsel %vm120, %v162, 0
    %166 = vmatpush.msra.mxu0 0.0
    %167 = vmatpush.msra.mxu0 0.0
    %168 = vmatpush.msra.mxu0 0.0
    %169 = vmatpush.msra.mxu0 0.0
    %170 = vmatpush.msra.mxu0 0.0
    %171 = vmatpush.msra.mxu0 0.0
    %172 = vmatpush.msra.mxu0 0.0
    %173 = vmatpush.msra.mxu0 0.0
    %174 = vmatpush.msra.mxu0 0.0
    %175 = vmatpush.msra.mxu0 0.0
    %176 = vmatpush.msra.mxu0 0.0
    %177 = vmatpush.msra.mxu0 0.0
    %178 = vmatpush.msra.mxu0 %v159
    %179 = vmatpush.msra.mxu0 %v158
    %180 = vmatpush.msra.mxu0 %v157
    %181 = vmatpush.msra.mxu0 %v156
    %182 = vmatmul.f32.gmra.mxu0 %v164
    %v183 = vpop.f32.mrf.mxu0
    %v184 = vadd.f32 0.0, %v183
    %185 = vdwg.mxu0
    %v186 = vsub.f32 0.0, %v184
    %v187 = vperm.slane %v186, 0
    %v189 = vsel %vm120, %v160, 0
    %v192 = vsel %vm120, %v161, 0
    %194 = vmatpush.msra.mxu0 0.0
    %195 = vmatpush.msra.mxu0 0.0
    %196 = vmatpush.msra.mxu0 0.0
    %197 = vmatpush.msra.mxu0 0.0
    %198 = vmatpush.msra.mxu0 0.0
    %199 = vmatpush.msra.mxu0 0.0
    %200 = vmatpush.msra.mxu0 0.0
    %201 = vmatpush.msra.mxu0 0.0
    %202 = vmatpush.msra.mxu0 0.0
    %203 = vmatpush.msra.mxu0 0.0
    %204 = vmatpush.msra.mxu0 0.0
    %205 = vmatpush.msra.mxu0 0.0
    %206 = vmatpush.msra.mxu0 %v159
    %207 = vmatpush.msra.mxu0 %v158
    %208 = vmatpush.msra.mxu0 %v157
    %209 = vmatpush.msra.mxu0 %v156
    %210 = vmatmul.f32.gmra.mxu0 %v189
    %v211 = vpop.f32.mrf.mxu0
    %v212 = vadd.f32 %v187, %v211
    %213 = vmatmul.f32.gmra.mxu0 %v192
    %v214 = vpop.f32.mrf.mxu0
    %v215 = vadd.f32 %v187, %v214
    %216 = vdwg.mxu0
    %v217 = vld [vmem:[#allocation5] sm:$0xff]
    %v218 = vld [vmem:[#allocation5 + $0x8] sm:$0xff]
    %v219 = vld [vmem:[#allocation5 + $0x10] sm:$0xff]
    %v220 = vld [vmem:[#allocation5 + $0x18] sm:$0xff]
    %v222 = vsel %vm120, 0.0, 0
    %224 = vmatpush.msra.mxu0 0.0
    %225 = vmatpush.msra.mxu0 0.0
    %226 = vmatpush.msra.mxu0 0.0
    %227 = vmatpush.msra.mxu0 0.0
    %228 = vmatpush.msra.mxu0 0.0
    %229 = vmatpush.msra.mxu0 0.0
    %230 = vmatpush.msra.mxu0 0.0
    %231 = vmatpush.msra.mxu0 0.0
    %232 = vmatpush.msra.mxu0 0.0
    %233 = vmatpush.msra.mxu0 0.0
    %234 = vmatpush.msra.mxu0 0.0
    %235 = vmatpush.msra.mxu0 0.0
    %236 = vmatpush.msra.mxu0 %v220
    %237 = vmatpush.msra.mxu0 %v219
    %238 = vmatpush.msra.mxu0 %v218
    %239 = vmatpush.msra.mxu0 %v217
    %240 = vmatmul.f32.gmra.mxu0 %v222
    %v241 = vpop.f32.mrf.mxu0
    %v242 = vadd.f32 0.0, %v241
    %243 = vdwg.mxu0
    %v244 = vadd.f32 %v212, %v242
    %v245 = vxor.u32 %v244, 2147483648
    %v246 = vmul.f32 %v245, 1.442695
    %v247 = vpow.pop %v246
    %v248 = vadd.f32 %v247, 1.0
    %v249 = vrcp.pop %v248
    %v250 = vmul.f32 %v248, %v249
    %v251 = vsub.f32 1.0, %v250
    %v252 = vmul.f32 %v249, %v251
    %v253 = vadd.f32 %v249, %v252
    %vm254 = vweird.f32 %v248
    %vm255 = vweird.f32 %v249
    %vm256 = vmor %vm254, %vm255
    %v257 = vsel %vm256, %v249, %v253
    %v258 = vand.u32 2147483647, %v248
    %vm259 = vcmp.eq.f32.partialorder %v258, 8.507059e+37
    %v260 = vand.u32 %v248, 2147483648
    %v261 = vor.u32 1.1754944e-38, %v260
    %v262 = vsel %vm259, %v261, %v257
    %v263 = vmul.f32 1.0, %v262
    %v264 = vtanh.pop %v244
    %v265 = vmul.f32 %v263, 0.0
    %267 = vrot.lane.b32.xlu0 %v264, 64
    %v268 = vpop.permute.xlu0 %267
    %v270 = vmul.f32 %v263, %v268
    %272 = vrot.lane.b32.xlu0 %v270, 32
    %v273 = vpop.permute.xlu0 %272
    %v275 = vadd.f32 %v265, %v273
    %v276 = vtanh.pop %v275
    %278 = vrot.lane.b32.xlu0 %v276, 64
    %v279 = vpop.permute.xlu0 %278
    %v281 = vmul.f32 %v263, %v279
    %283 = vrot.lane.b32.xlu0 %v281, 32
    %v284 = vpop.permute.xlu0 %283
    %vm286 = vcmask 254976
    %287 = vst.msk [vmem:[#allocation7] sm:$0x3] %vm286, %v284
    %v288 = vsel %vm120, %v284, 0
    %290 = vmatpush.msra.mxu0 0.0
    %291 = vmatpush.msra.mxu0 0.0
    %292 = vmatpush.msra.mxu0 0.0
    %293 = vmatpush.msra.mxu0 0.0
    %294 = vmatpush.msra.mxu0 0.0
    %295 = vmatpush.msra.mxu0 0.0
    %296 = vmatpush.msra.mxu0 0.0
    %297 = vmatpush.msra.mxu0 0.0
    %298 = vmatpush.msra.mxu0 0.0
    %299 = vmatpush.msra.mxu0 0.0
    %300 = vmatpush.msra.mxu0 0.0
    %301 = vmatpush.msra.mxu0 0.0
    %302 = vmatpush.msra.mxu0 %v220
    %303 = vmatpush.msra.mxu0 %v219
    %304 = vmatpush.msra.mxu0 %v218
    %305 = vmatpush.msra.mxu0 %v217
    %306 = vmatmul.f32.gmra.mxu0 %v288
    %v307 = vpop.f32.mrf.mxu0
    %v308 = vadd.f32 0.0, %v307
    %309 = vdwg.mxu0
    %v311 = vrot.slane %v308, 6
    %v313 = vadd.f32 %v212, %v311
    %v314 = vxor.u32 %v313, 2147483648
    %v315 = vmul.f32 %v314, 1.442695
    %v316 = vpow.pop %v315
    %v317 = vadd.f32 %v316, 1.0
    %v318 = vrcp.pop %v317
    %v319 = vmul.f32 %v317, %v318
    %v320 = vsub.f32 1.0, %v319
    %v321 = vmul.f32 %v318, %v320
    %v322 = vadd.f32 %v318, %v321
    %vm323 = vweird.f32 %v317
    %vm324 = vweird.f32 %v318
    %vm325 = vmor %vm323, %vm324
    %v326 = vsel %vm325, %v318, %v322
    %v327 = vand.u32 2147483647, %v317
    %vm328 = vcmp.eq.f32.partialorder %v327, 8.507059e+37
    %v329 = vand.u32 %v317, 2147483648
    %v330 = vor.u32 1.1754944e-38, %v329
    %v331 = vsel %vm328, %v330, %v326
    %v332 = vmul.f32 1.0, %v331
    %v333 = vtanh.pop %v313
    %v335 = vrot.slane %v275, 6
    %v337 = vmul.f32 %v332, %v335
    %339 = vrot.lane.b32.xlu0 %v333, 64
    %v340 = vpop.permute.xlu0 %339
    %v342 = vmul.f32 %v332, %v340
    %344 = vrot.lane.b32.xlu0 %v342, 32
    %v345 = vpop.permute.xlu0 %344
    %v347 = vadd.f32 %v337, %v345
    %v348 = vtanh.pop %v347
    %350 = vrot.lane.b32.xlu0 %v348, 64
    %v351 = vpop.permute.xlu0 %350
    %v353 = vmul.f32 %v332, %v351
    %355 = vrot.lane.b32.xlu0 %v353, 32
    %v356 = vpop.permute.xlu0 %355
    %s358 = scalar_lea.vmem [#allocation7], 2
    %vm359 = vcmask 257026
    %360 = vst.msk [vmem:[%s358 - $0x2] sm:$0xc] %vm359, %v356
    %v361 = vrot.slane %v353, 2
    %362 = vrot.lane.b32.xlu0 %v361, 32
    %v363 = vpop.permute.xlu0 %362
    %v364 = vsel %vm120, %v363, 0
    %366 = vmatpush.msra.mxu0 0.0
    %367 = vmatpush.msra.mxu0 0.0
    %368 = vmatpush.msra.mxu0 0.0
    %369 = vmatpush.msra.mxu0 0.0
    %370 = vmatpush.msra.mxu0 0.0
    %371 = vmatpush.msra.mxu0 0.0
    %372 = vmatpush.msra.mxu0 0.0
    %373 = vmatpush.msra.mxu0 0.0
    %374 = vmatpush.msra.mxu0 0.0
    %375 = vmatpush.msra.mxu0 0.0
    %376 = vmatpush.msra.mxu0 0.0
    %377 = vmatpush.msra.mxu0 0.0
    %378 = vmatpush.msra.mxu0 %v220
    %379 = vmatpush.msra.mxu0 %v219
    %380 = vmatpush.msra.mxu0 %v218
    %381 = vmatpush.msra.mxu0 %v217
    %382 = vmatmul.f32.gmra.mxu0 %v364
    %v383 = vpop.f32.mrf.mxu0
    %v384 = vadd.f32 0.0, %v383
    %385 = vdwg.mxu0
    %v387 = vrot.slane %v384, 4
    %v389 = vadd.f32 %v212, %v387
    %v390 = vxor.u32 %v389, 2147483648
    %v391 = vmul.f32 %v390, 1.442695
    %v392 = vpow.pop %v391
    %v393 = vadd.f32 %v392, 1.0
    %v394 = vrcp.pop %v393
    %v395 = vmul.f32 %v393, %v394
    %v396 = vsub.f32 1.0, %v395
    %v397 = vmul.f32 %v394, %v396
    %v398 = vadd.f32 %v394, %v397
    %vm399 = vweird.f32 %v393
    %vm400 = vweird.f32 %v394
    %vm401 = vmor %vm399, %vm400
    %v402 = vsel %vm401, %v394, %v398
    %v403 = vand.u32 2147483647, %v393
    %vm404 = vcmp.eq.f32.partialorder %v403, 8.507059e+37
    %v405 = vand.u32 %v393, 2147483648
    %v406 = vor.u32 1.1754944e-38, %v405
    %v407 = vsel %vm404, %v406, %v402
    %v408 = vmul.f32 1.0, %v407
    %v409 = vtanh.pop %v389
    %v411 = vrot.slane %v347, 6
    %v413 = vmul.f32 %v408, %v411
    %415 = vrot.lane.b32.xlu0 %v409, 64
    %v416 = vpop.permute.xlu0 %415
    %v418 = vmul.f32 %v408, %v416
    %420 = vrot.lane.b32.xlu0 %v418, 32
    %v421 = vpop.permute.xlu0 %420
    %v423 = vadd.f32 %v413, %v421
    %v424 = vtanh.pop %v423
    %426 = vrot.lane.b32.xlu0 %v424, 64
    %v427 = vpop.permute.xlu0 %426
    %v429 = vmul.f32 %v408, %v427
    %431 = vrot.lane.b32.xlu0 %v429, 32
    %v432 = vpop.permute.xlu0 %431
    %s434 = scalar_lea.vmem [#allocation7], 4
    %vm435 = vcmask 259076
    %436 = vst.msk [vmem:[%s434 - $0x4] sm:$0x30] %vm435, %v432
    %v437 = vrot.slane %v429, 4
    %438 = vrot.lane.b32.xlu0 %v437, 32
    %v439 = vpop.permute.xlu0 %438
    %v440 = vsel %vm120, %v439, 0
    %442 = vmatpush.msra.mxu0 0.0
    %443 = vmatpush.msra.mxu0 0.0
    %444 = vmatpush.msra.mxu0 0.0
    %445 = vmatpush.msra.mxu0 0.0
    %446 = vmatpush.msra.mxu0 0.0
    %447 = vmatpush.msra.mxu0 0.0
    %448 = vmatpush.msra.mxu0 0.0
    %449 = vmatpush.msra.mxu0 0.0
    %450 = vmatpush.msra.mxu0 0.0
    %451 = vmatpush.msra.mxu0 0.0
    %452 = vmatpush.msra.mxu0 0.0
    %453 = vmatpush.msra.mxu0 0.0
    %454 = vmatpush.msra.mxu0 %v220
    %455 = vmatpush.msra.mxu0 %v219
    %456 = vmatpush.msra.mxu0 %v218
    %457 = vmatpush.msra.mxu0 %v217
    %458 = vmatmul.f32.gmra.mxu0 %v440
    %v459 = vpop.f32.mrf.mxu0
    %v460 = vadd.f32 0.0, %v459
    %461 = vdwg.mxu0
    %v463 = vrot.slane %v460, 2
    %v465 = vadd.f32 %v212, %v463
    %v466 = vxor.u32 %v465, 2147483648
    %v467 = vmul.f32 %v466, 1.442695
    %v468 = vpow.pop %v467
    %v469 = vadd.f32 %v468, 1.0
    %v470 = vrcp.pop %v469
    %v471 = vmul.f32 %v469, %v470
    %v472 = vsub.f32 1.0, %v471
    %v473 = vmul.f32 %v470, %v472
    %v474 = vadd.f32 %v470, %v473
    %vm475 = vweird.f32 %v469
    %vm476 = vweird.f32 %v470
    %vm477 = vmor %vm475, %vm476
    %v478 = vsel %vm477, %v470, %v474
    %v479 = vand.u32 2147483647, %v469
    %vm480 = vcmp.eq.f32.partialorder %v479, 8.507059e+37
    %v481 = vand.u32 %v469, 2147483648
    %v482 = vor.u32 1.1754944e-38, %v481
    %v483 = vsel %vm480, %v482, %v478
    %v484 = vmul.f32 1.0, %v483
    %v485 = vtanh.pop %v465
    %v487 = vrot.slane %v423, 6
    %v489 = vmul.f32 %v484, %v487
    %491 = vrot.lane.b32.xlu0 %v485, 64
    %v492 = vpop.permute.xlu0 %491
    %v494 = vmul.f32 %v484, %v492
    %496 = vrot.lane.b32.xlu0 %v494, 32
    %v497 = vpop.permute.xlu0 %496
    %v499 = vadd.f32 %v489, %v497
    %v500 = vtanh.pop %v499
    %502 = vrot.lane.b32.xlu0 %v500, 64
    %v503 = vpop.permute.xlu0 %502
    %v505 = vmul.f32 %v484, %v503
    %507 = vrot.lane.b32.xlu0 %v505, 32
    %v508 = vpop.permute.xlu0 %507
    %s510 = scalar_lea.vmem [#allocation7], 6
    %vm511 = vcmask 261126
    %512 = vst.msk [vmem:[%s510 - $0x6] sm:$0xc0] %vm511, %v508
    %v513 = vrot.slane %v505, 6
    %514 = vrot.lane.b32.xlu0 %v513, 32
    %v515 = vpop.permute.xlu0 %514
    %v516 = vsel %vm120, %v515, 0
    %518 = vmatpush.msra.mxu0 0.0
    %519 = vmatpush.msra.mxu0 0.0
    %520 = vmatpush.msra.mxu0 0.0
    %521 = vmatpush.msra.mxu0 0.0
    %522 = vmatpush.msra.mxu0 0.0
    %523 = vmatpush.msra.mxu0 0.0
    %524 = vmatpush.msra.mxu0 0.0
    %525 = vmatpush.msra.mxu0 0.0
    %526 = vmatpush.msra.mxu0 0.0
    %527 = vmatpush.msra.mxu0 0.0
    %528 = vmatpush.msra.mxu0 0.0
    %529 = vmatpush.msra.mxu0 0.0
    %530 = vmatpush.msra.mxu0 %v220
    %531 = vmatpush.msra.mxu0 %v219
    %532 = vmatpush.msra.mxu0 %v218
    %533 = vmatpush.msra.mxu0 %v217
    %534 = vmatmul.f32.gmra.mxu0 %v516
    %v535 = vpop.f32.mrf.mxu0
    %v536 = vadd.f32 0.0, %v535
    %537 = vdwg.mxu0
    %v538 = vadd.f32 %v215, %v536
    %v539 = vxor.u32 %v538, 2147483648
    %v540 = vmul.f32 %v539, 1.442695
    %v541 = vpow.pop %v540
    %v542 = vadd.f32 %v541, 1.0
    %v543 = vrcp.pop %v542
    %v544 = vmul.f32 %v542, %v543
    %v545 = vsub.f32 1.0, %v544
    %v546 = vmul.f32 %v543, %v545
    %v547 = vadd.f32 %v543, %v546
    %vm548 = vweird.f32 %v542
    %vm549 = vweird.f32 %v543
    %vm550 = vmor %vm548, %vm549
    %v551 = vsel %vm550, %v543, %v547
    %v552 = vand.u32 2147483647, %v542
    %vm553 = vcmp.eq.f32.partialorder %v552, 8.507059e+37
    %v554 = vand.u32 %v542, 2147483648
    %v555 = vor.u32 1.1754944e-38, %v554
    %v556 = vsel %vm553, %v555, %v551
    %v557 = vmul.f32 1.0, %v556
    %v558 = vtanh.pop %v538
    %v560 = vrot.slane %v499, 6
    %v562 = vmul.f32 %v557, %v560
    %564 = vrot.lane.b32.xlu0 %v558, 64
    %v565 = vpop.permute.xlu0 %564
    %v567 = vmul.f32 %v557, %v565
    %569 = vrot.lane.b32.xlu0 %v567, 32
    %v570 = vpop.permute.xlu0 %569
    %v572 = vadd.f32 %v562, %v570
    %v573 = vtanh.pop %v572
    %575 = vrot.lane.b32.xlu0 %v573, 64
    %v576 = vpop.permute.xlu0 %575
    %v578 = vmul.f32 %v557, %v576
    %580 = vrot.lane.b32.xlu0 %v578, 32
    %v581 = vpop.permute.xlu0 %580
    %s583 = scalar_lea.vmem [#allocation7], 8
    %584 = vst.msk [vmem:[%s583] sm:$0x3] %vm286, %v581
    %v585 = vsel %vm120, %v581, 0
    %587 = vmatpush.msra.mxu0 0.0
    %588 = vmatpush.msra.mxu0 0.0
    %589 = vmatpush.msra.mxu0 0.0
    %590 = vmatpush.msra.mxu0 0.0
    %591 = vmatpush.msra.mxu0 0.0
    %592 = vmatpush.msra.mxu0 0.0
    %593 = vmatpush.msra.mxu0 0.0
    %594 = vmatpush.msra.mxu0 0.0
    %595 = vmatpush.msra.mxu0 0.0
    %596 = vmatpush.msra.mxu0 0.0
    %597 = vmatpush.msra.mxu0 0.0
    %598 = vmatpush.msra.mxu0 0.0
    %599 = vmatpush.msra.mxu0 %v220
    %600 = vmatpush.msra.mxu0 %v219
    %601 = vmatpush.msra.mxu0 %v218
    %602 = vmatpush.msra.mxu0 %v217
    %603 = vmatmul.f32.gmra.mxu0 %v585
    %v604 = vpop.f32.mrf.mxu0
    %v605 = vadd.f32 0.0, %v604
    %606 = vdwg.mxu0
    %v608 = vrot.slane %v605, 6
    %v610 = vadd.f32 %v215, %v608
    %v611 = vxor.u32 %v610, 2147483648
    %v612 = vmul.f32 %v611, 1.442695
    %v613 = vpow.pop %v612
    %v614 = vadd.f32 %v613, 1.0
    %v615 = vrcp.pop %v614
    %v616 = vmul.f32 %v614, %v615
    %v617 = vsub.f32 1.0, %v616
    %v618 = vmul.f32 %v615, %v617
    %v619 = vadd.f32 %v615, %v618
    %vm620 = vweird.f32 %v614
    %vm621 = vweird.f32 %v615
    %vm622 = vmor %vm620, %vm621
    %v623 = vsel %vm622, %v615, %v619
    %v624 = vand.u32 2147483647, %v614
    %vm625 = vcmp.eq.f32.partialorder %v624, 8.507059e+37
    %v626 = vand.u32 %v614, 2147483648
    %v627 = vor.u32 1.1754944e-38, %v626
    %v628 = vsel %vm625, %v627, %v623
    %v629 = vmul.f32 1.0, %v628
    %v630 = vtanh.pop %v610
    %v632 = vrot.slane %v572, 6
    %v634 = vmul.f32 %v629, %v632
    %636 = vrot.lane.b32.xlu0 %v630, 64
    %v637 = vpop.permute.xlu0 %636
    %v639 = vmul.f32 %v629, %v637
    %641 = vrot.lane.b32.xlu0 %v639, 32
    %v642 = vpop.permute.xlu0 %641
    %v644 = vadd.f32 %v634, %v642
    %v645 = vtanh.pop %v644
    %647 = vrot.lane.b32.xlu0 %v645, 64
    %v648 = vpop.permute.xlu0 %647
    %v650 = vmul.f32 %v629, %v648
    %652 = vrot.lane.b32.xlu0 %v650, 32
    %v653 = vpop.permute.xlu0 %652
    %s655 = scalar_lea.vmem [#allocation7], 10
    %656 = vst.msk [vmem:[%s655 - $0x2] sm:$0xc] %vm359, %v653
    %v657 = vrot.slane %v650, 2
    %658 = vrot.lane.b32.xlu0 %v657, 32
    %v659 = vpop.permute.xlu0 %658
    %v660 = vsel %vm120, %v659, 0
    %662 = vmatpush.msra.mxu0 0.0
    %663 = vmatpush.msra.mxu0 0.0
    %664 = vmatpush.msra.mxu0 0.0
    %665 = vmatpush.msra.mxu0 0.0
    %666 = vmatpush.msra.mxu0 0.0
    %667 = vmatpush.msra.mxu0 0.0
    %668 = vmatpush.msra.mxu0 0.0
    %669 = vmatpush.msra.mxu0 0.0
    %670 = vmatpush.msra.mxu0 0.0
    %671 = vmatpush.msra.mxu0 0.0
    %672 = vmatpush.msra.mxu0 0.0
    %673 = vmatpush.msra.mxu0 0.0
    %674 = vmatpush.msra.mxu0 %v220
    %675 = vmatpush.msra.mxu0 %v219
    %676 = vmatpush.msra.mxu0 %v218
    %677 = vmatpush.msra.mxu0 %v217
    %678 = vmatmul.f32.gmra.mxu0 %v660
    %v679 = vpop.f32.mrf.mxu0
    %v680 = vadd.f32 0.0, %v679
    %681 = vdwg.mxu0
    %v683 = vrot.slane %v680, 4
    %v685 = vadd.f32 %v215, %v683
    %v686 = vxor.u32 %v685, 2147483648
    %v687 = vmul.f32 %v686, 1.442695
    %v688 = vpow.pop %v687
    %v689 = vadd.f32 %v688, 1.0
    %v690 = vrcp.pop %v689
    %v691 = vmul.f32 %v689, %v690
    %v692 = vsub.f32 1.0, %v691
    %v693 = vmul.f32 %v690, %v692
    %v694 = vadd.f32 %v690, %v693
    %vm695 = vweird.f32 %v689
    %vm696 = vweird.f32 %v690
    %vm697 = vmor %vm695, %vm696
    %v698 = vsel %vm697, %v690, %v694
    %v699 = vand.u32 2147483647, %v689
    %vm700 = vcmp.eq.f32.partialorder %v699, 8.507059e+37
    %v701 = vand.u32 %v689, 2147483648
    %v702 = vor.u32 1.1754944e-38, %v701
    %v703 = vsel %vm700, %v702, %v698
    %v704 = vmul.f32 1.0, %v703
    %v705 = vtanh.pop %v685
    %v707 = vrot.slane %v644, 6
    %v709 = vmul.f32 %v704, %v707
    %711 = vrot.lane.b32.xlu0 %v705, 64
    %v712 = vpop.permute.xlu0 %711
    %v714 = vmul.f32 %v704, %v712
    %716 = vrot.lane.b32.xlu0 %v714, 32
    %v717 = vpop.permute.xlu0 %716
    %v719 = vadd.f32 %v709, %v717
    %v720 = vtanh.pop %v719
    %722 = vrot.lane.b32.xlu0 %v720, 64
    %v723 = vpop.permute.xlu0 %722
    %v725 = vmul.f32 %v704, %v723
    %727 = vrot.lane.b32.xlu0 %v725, 32
    %v728 = vpop.permute.xlu0 %727
    %s730 = scalar_lea.vmem [#allocation7], 12
    %731 = vst.msk [vmem:[%s730 - $0x4] sm:$0x30] %vm435, %v728
    %v732 = vrot.slane %v725, 4
    %733 = vrot.lane.b32.xlu0 %v732, 32
    %v734 = vpop.permute.xlu0 %733
    %v735 = vsel %vm120, %v734, 0
    %737 = vmatpush.msra.mxu0 0.0
    %738 = vmatpush.msra.mxu0 0.0
    %739 = vmatpush.msra.mxu0 0.0
    %740 = vmatpush.msra.mxu0 0.0
    %741 = vmatpush.msra.mxu0 0.0
    %742 = vmatpush.msra.mxu0 0.0
    %743 = vmatpush.msra.mxu0 0.0
    %744 = vmatpush.msra.mxu0 0.0
    %745 = vmatpush.msra.mxu0 0.0
    %746 = vmatpush.msra.mxu0 0.0
    %747 = vmatpush.msra.mxu0 0.0
    %748 = vmatpush.msra.mxu0 0.0
    %749 = vmatpush.msra.mxu0 %v220
    %750 = vmatpush.msra.mxu0 %v219
    %751 = vmatpush.msra.mxu0 %v218
    %752 = vmatpush.msra.mxu0 %v217
    %753 = vmatmul.f32.gmra.mxu0 %v735
    %v754 = vpop.f32.mrf.mxu0
    %v755 = vadd.f32 0.0, %v754
    %756 = vdwg.mxu0
    %v758 = vrot.slane %v755, 2
    %v760 = vadd.f32 %v215, %v758
    %v761 = vxor.u32 %v760, 2147483648
    %v762 = vmul.f32 %v761, 1.442695
    %v763 = vpow.pop %v762
    %v764 = vadd.f32 %v763, 1.0
    %v765 = vrcp.pop %v764
    %v766 = vmul.f32 %v764, %v765
    %v767 = vsub.f32 1.0, %v766
    %v768 = vmul.f32 %v765, %v767
    %v769 = vadd.f32 %v765, %v768
    %vm770 = vweird.f32 %v764
    %vm771 = vweird.f32 %v765
    %vm772 = vmor %vm770, %vm771
    %v773 = vsel %vm772, %v765, %v769
    %v774 = vand.u32 2147483647, %v764
    %vm775 = vcmp.eq.f32.partialorder %v774, 8.507059e+37
    %v776 = vand.u32 %v764, 2147483648
    %v777 = vor.u32 1.1754944e-38, %v776
    %v778 = vsel %vm775, %v777, %v773
    %v779 = vmul.f32 1.0, %v778
    %v780 = vtanh.pop %v760
    %v782 = vrot.slane %v719, 6
    %v784 = vmul.f32 %v779, %v782
    %786 = vrot.lane.b32.xlu0 %v780, 64
    %v787 = vpop.permute.xlu0 %786
    %v789 = vmul.f32 %v779, %v787
    %791 = vrot.lane.b32.xlu0 %v789, 32
    %v792 = vpop.permute.xlu0 %791
    %v794 = vadd.f32 %v784, %v792
    %v795 = vtanh.pop %v794
    %797 = vrot.lane.b32.xlu0 %v795, 64
    %v798 = vpop.permute.xlu0 %797
    %v800 = vmul.f32 %v779, %v798
    %802 = vrot.lane.b32.xlu0 %v800, 32
    %v803 = vpop.permute.xlu0 %802
    %s805 = scalar_lea.vmem [#allocation7], 14
    %806 = vst.msk [vmem:[%s805 - $0x6] sm:$0xc0] %vm511, %v803
    %807 = vst.msk [vmem:[#allocation8 - $0x6] sm:$0xc0] %vm511, %v803
    %809 = vrot.lane.b32.xlu0 %v794, 96
    %v810 = vpop.permute.xlu0 %809
    %812 = vst.msk [vmem:[#allocation10 - $0x6] sm:$0xc0] %vm511, %v810
    // Predicated region
    $region26: #{tpu_custom_call.1} parent=1 // pred_check
      _
    $region27: #{tpu_custom_call.1} parent=1 // pred_check_branch
      %814 = sbr.rel (0) target = $region29
    $region28: #{tpu_custom_call.1} parent=1 // pred_region
      %816 = vsyncadd [#allocation4], 0
      %s817 = sshll.u32 [#allocation7], 4
      %s818 = int_to_ptr.vmem [resolvable:$true] %s817
      %s819 = sshll.u32 %s4, 4
      %s820 = int_to_ptr.hbm [resolvable:$true] %s819
      %825 = dma.vmem_to_hbm [thread:$0]  %s818, 256, %s820, [#allocation4], 32, 32, 2
    $region29: #{tpu_custom_call.1} parent=1 // pred_fallthru
      _
    // Predicated region
    $region30: #{tpu_custom_call.1} parent=1 // pred_check
      _
    $region31: #{tpu_custom_call.1} parent=1 // pred_check_branch
      %827 = sbr.rel (0) target = $region33
    $region32: #{tpu_custom_call.1} parent=1 // pred_region
      %829 = vsyncadd [#allocation9], 0
      %s831 = sshll.u32 [#allocation8], 4
      %s832 = int_to_ptr.vmem [resolvable:$true] %s831
      %s833 = sshll.u32 %s5, 4
      %s834 = int_to_ptr.hbm [resolvable:$true] %s833
      %836 = dma.vmem_to_hbm [thread:$0]  %s832, 32, %s834, [#allocation9]
    $region33: #{tpu_custom_call.1} parent=1 // pred_fallthru
      _
    // Predicated region
    $region34: #{tpu_custom_call.1} parent=1 // pred_check
      _
    $region35: #{tpu_custom_call.1} parent=1 // pred_check_branch
      %838 = sbr.rel (0) target = $region37
    $region36: #{tpu_custom_call.1} parent=1 // pred_region
      %840 = vsyncadd [#allocation9], 0
      %s842 = sshll.u32 [#allocation10], 4
      %s843 = int_to_ptr.vmem [resolvable:$true] %s842
      %s844 = sshll.u32 %s6, 4
      %s845 = int_to_ptr.hbm [resolvable:$true] %s844
      %847 = dma.vmem_to_hbm [thread:$0]  %s843, 32, %s845, [#allocation9]
    $region37: #{tpu_custom_call.1} parent=1 // pred_fallthru
      _
    // Predicated region
    $region38: #{tpu_custom_call.1} parent=1 // pred_check
      _
    $region39: #{tpu_custom_call.1} parent=1 // pred_check_branch
      %849 = sbr.rel (0) target = $region41
    $region40: #{tpu_custom_call.1} parent=1 // pred_region
      %851 = dma.done [#allocation4], 256
    $region41: #{tpu_custom_call.1} parent=1 // pred_fallthru
      _
    // Predicated region
    $region42: #{tpu_custom_call.1} parent=1 // pred_check
      _
    $region43: #{tpu_custom_call.1} parent=1 // pred_check_branch
      %853 = sbr.rel (0) target = $region45
    $region44: #{tpu_custom_call.1} parent=1 // pred_region
      %855 = dma.done [#allocation9], 32
    $region45: #{tpu_custom_call.1} parent=1 // pred_fallthru
      _
    // Predicated region
    $region46: #{tpu_custom_call.1} parent=1 // pred_check
      _
    $region47: #{tpu_custom_call.1} parent=1 // pred_check_branch
      %857 = sbr.rel (0) target = $region49
    $region48: #{tpu_custom_call.1} parent=1 // pred_region
      %859 = dma.done [#allocation9], 32
    $region49: #{tpu_custom_call.1} parent=1 // pred_fallthru
      _
    %860 = vsyncpa [#allocation3], 1
    %861 = vsyncpa [#allocation6], 1
    %862 = vsyncpa [#allocation4], 1
    %863 = vsyncpa [#allocation9], 1

</llo_original>
